<compile_context>
chip_gen: v6e
topology: v6e:2x2x1
jax: 0.10.0
libtpu: 0.0.40
codegen_flags: <defaults>
</compile_context>

<pallas_src>
import functools

import jax
import jax.numpy as jnp
from jax import lax
from jax.experimental import pallas as pl
from jax.experimental.pallas import tpu as pltpu

ALPHA = 1.0
GAMMA = 2.0


def _make_focal_kernel(n_rows: int, tile_n: int):
    """Kernel: per grid step, write the partial CE sum of its row-tile."""
    ragged = (n_rows % tile_n) != 0

    def kernel(logits_ref, target_ref, out_ref):
        # Upcast the tile inside the kernel (input streamed in native dtype).
        logits = logits_ref[...].astype(jnp.float32)          # (tile_n, C)
        tgt = target_ref[...]                                  # (tile_n, 1) i32

        # Numerically-stable per-row log-softmax cross entropy.
        row_max = jnp.max(logits, axis=-1, keepdims=True)                      # (tile_n, 1)
        lse = row_max + jnp.log(
            jnp.sum(jnp.exp(logits - row_max), axis=-1, keepdims=True))        # (tile_n, 1)
        col = lax.broadcasted_iota(jnp.int32, logits.shape, 1)                 # (tile_n, C)
        picked = jnp.sum(jnp.where(col == tgt, logits, 0.0),
                         axis=-1, keepdims=True)                               # (tile_n, 1)
        ce_per_row = lse - picked                                              # (tile_n, 1)

        def emit(ce_rows):
            # Lane-dense (1, 8, 128) output block filled with this tile's partial sum.
            out_ref[...] = jnp.full((1, 8, 128), jnp.sum(ce_rows), dtype=jnp.float32)

        if ragged:
            pid = pl.program_id(0)
            is_last = pid == pl.num_programs(0) - 1

            @pl.when(is_last)
            def _():
                # Mask rows of the (padded) final tile that lie past N.
                # jnp.where is a true select, so garbage (NaN/Inf) in padded rows
                # never reaches the sum.
                row_ids = pid * tile_n + lax.broadcasted_iota(
                    jnp.int32, ce_per_row.shape, 0)
                emit(jnp.where(row_ids < n_rows, ce_per_row, 0.0))

            @pl.when(jnp.logical_not(is_last))
            def _():
                emit(ce_per_row)
        else:
            emit(ce_per_row)

    return kernel


@functools.partial(jax.jit, static_argnames=("alpha", "gamma", "tile_n"))
def focal_loss(predicted: jax.Array, target: jax.Array,
               *, alpha: float = ALPHA, gamma: float = GAMMA,
               tile_n=None) -> jax.Array:
    """predicted: (N, C) logits (any float dtype); target: (N,) int class indices.
    Returns scalar f32 focal loss (alpha/gamma/reduction per module defaults)."""
    n, c = predicted.shape
    itemsize = predicted.dtype.itemsize

    # Pick a row tile so the logits block is ~1 MiB, capped at 4096 rows
    # (bounds the lane-padded (tile_n, 1) target buffer), multiple of 8;
    # or the full array when it is small (always a legal block).
    if tile_n is None:
        tile_n = (1 << 20) // max(1, c * itemsize)
        tile_n = max(8, min(int(tile_n), 4096))
    if n <= tile_n:
        tile_n = n
    else:
        tile_n = max(8, (int(tile_n) // 8) * 8)
    grid_n = pl.cdiv(n, tile_n)

    target2d = target.astype(jnp.int32).reshape(n, 1)

    # Explicit VMEM budget: double-buffered logits + lane-padded target + out block.
    logits_blk = tile_n * c * itemsize
    target_blk = tile_n * 128 * 4          # (tile_n, 1) i32 is lane-padded in VMEM
    out_blk = 8 * 128 * 4
    vmem_limit = int(min(max(2 * (logits_blk + target_blk + out_blk) + (4 << 20),
                             16 << 20), 32 << 20))

    partials = pl.pallas_call(
        _make_focal_kernel(n, tile_n),
        out_shape=jax.ShapeDtypeStruct((grid_n, 8, 128), jnp.float32),
        grid_spec=pltpu.PrefetchScalarGridSpec(
            num_scalar_prefetch=0,
            grid=(grid_n,),
            in_specs=[
                pl.BlockSpec((tile_n, c), lambda i: (i, 0)),    # streamed logits tile
                pl.BlockSpec((tile_n, 1), lambda i: (i, 0)),    # streamed target tile
            ],
            out_specs=pl.BlockSpec((1, 8, 128), lambda i: (i, 0, 0)),
        ),
        compiler_params=pltpu.CompilerParams(
            dimension_semantics=("parallel",),   # independent per-tile partial sums
            vmem_limit_bytes=vmem_limit,
        ),
    )(predicted, target2d)                                      # no wrapper dtype cast

    # Tiny scalar epilogue in JAX (removes serialized last-step dependency).
    ce = jnp.sum(partials[:, 0, 0]) / jnp.float32(n)
    pt = jnp.exp(-ce)
    one_minus_pt = 1.0 - pt
    if float(gamma) == 2.0:
        mod = one_minus_pt * one_minus_pt
    else:
        mod = one_minus_pt ** jnp.float32(gamma)
    return jnp.float32(alpha) * mod * ce


def _focal_loss_ref(predicted, target, alpha=ALPHA, gamma=GAMMA):
    logp = jax.nn.log_softmax(predicted.astype(jnp.float32), axis=-1)
    ce = -jnp.take_along_axis(logp, target.reshape(-1, 1), axis=-1).mean()
    pt = jnp.exp(-ce)
    return alpha * (1.0 - pt) ** gamma * ce


if __name__ == "__main__":
    key = jax.random.PRNGKey(0)
    k1, k2, k3, k4 = jax.random.split(key, 4)

    # Small shape consistent with the module's forward (batch=8 rows, 32 classes).
    N1, C1 = 8, 32
    pred1 = jax.random.normal(k1, (N1, C1), dtype=jnp.float32)
    tgt1 = jax.random.randint(k2, (N1,), 0, C1, dtype=jnp.int32)
    out1 = focal_loss(pred1, tgt1)
    jax.block_until_ready(out1)
    ref1 = _focal_loss_ref(pred1, tgt1)
    assert jnp.allclose(out1, ref1, rtol=1e-5, atol=1e-5), (out1, ref1)

    # Larger batch exercising the multi-tile streaming path + gated last-tile masking.
    N2, C2 = 700, 32
    pred2 = jax.random.normal(k3, (N2, C2), dtype=jnp.float32)
    tgt2 = jax.random.randint(k4, (N2,), 0, C2, dtype=jnp.int32)
    out2 = focal_loss(pred2, tgt2, tile_n=512)   # force grid_n=2 with a ragged tail
    jax.block_until_ready(out2)
    ref2 = _focal_loss_ref(pred2, tgt2)
    assert jnp.allclose(out2, ref2, rtol=1e-5, atol=1e-5), (out2, ref2)

    print("KERNEL_OK")
</pallas_src>

<mosaic_0001>
module attributes {stable_mosaic.version = 11 : i64} {
  func.func @kernel(%arg0: i32, %arg1: memref<8x32xf32, #tpu.memory_space<vmem>>, %arg2: memref<8x1xi32, #tpu.memory_space<vmem>>, %arg3: memref<1x8x128xf32, #tpu.memory_space<vmem>>) attributes {dimension_semantics = [#tpu.dimension_semantics<parallel>], iteration_bounds = array<i64: 1>, scalar_prefetch = 0 : i64, scratch_operands = 0 : i64, tpu.core_type = #tpu.core_type<tc>, window_params = [{transform_indices = @transform_0, window_bounds = array<i64: 8, 32>}, {transform_indices = @transform_1, window_bounds = array<i64: 8, 1>}, {transform_indices = @transform_2, window_bounds = array<i64: 1, 8, 128>}]} {
    %c0 = arith.constant 0 : index
    %c0_0 = arith.constant 0 : index
    %0 = vector.load %arg1[%c0, %c0_0] : memref<8x32xf32, #tpu.memory_space<vmem>>, vector<8x32xf32>
    %c0_1 = arith.constant 0 : index
    %c0_2 = arith.constant 0 : index
    %1 = vector.load %arg2[%c0_1, %c0_2] : memref<8x1xi32, #tpu.memory_space<vmem>>, vector<8x1xi32>
    %cst = arith.constant dense<0xFF800000> : vector<8xf32>
    %2 = vector.multi_reduction <maximumf>, %0, %cst [1] : vector<8x32xf32> to vector<8xf32>
    %3 = vector.shape_cast %2 : vector<8xf32> to vector<8x1xf32>
    %4 = vector.broadcast %3 : vector<8x1xf32> to vector<8x32xf32>
    %5 = arith.subf %0, %4 : vector<8x32xf32>
    %6 = math.exp %5 : vector<8x32xf32>
    %cst_3 = arith.constant dense<0.000000e+00> : vector<8xf32>
    %7 = vector.multi_reduction <add>, %6, %cst_3 [1] : vector<8x32xf32> to vector<8xf32>
    %8 = vector.shape_cast %7 : vector<8xf32> to vector<8x1xf32>
    %9 = math.log %8 : vector<8x1xf32>
    %10 = arith.addf %3, %9 : vector<8x1xf32>
    %11 = tpu.iota {dimensions = array<i32: 1>} : vector<8x32xi32>
    %12 = vector.broadcast %1 : vector<8x1xi32> to vector<8x32xi32>
    %13 = arith.cmpi eq, %11, %12 : vector<8x32xi32>
    %cst_4 = arith.constant 0.000000e+00 : f32
    %14 = vector.broadcast %cst_4 : f32 to vector<8x32xf32>
    %15 = arith.select %13, %0, %14 : vector<8x32xi1>, vector<8x32xf32>
    %cst_5 = arith.constant dense<0.000000e+00> : vector<8xf32>
    %16 = vector.multi_reduction <add>, %15, %cst_5 [1] : vector<8x32xf32> to vector<8xf32>
    %17 = vector.shape_cast %16 : vector<8xf32> to vector<8x1xf32>
    %18 = arith.subf %10, %17 : vector<8x1xf32>
    %19 = vector.shape_cast %18 : vector<8x1xf32> to vector<1x8x1xf32>
    %cst_6 = arith.constant dense<0.000000e+00> : vector<1xf32>
    %20 = vector.multi_reduction <add>, %19, %cst_6 [1, 2] : vector<1x8x1xf32> to vector<1xf32>
    %21 = vector.shape_cast %20 : vector<1xf32> to vector<1x1x1xf32>
    %22 = vector.extract %21[0, 0, 0] : f32 from vector<1x1x1xf32>
    %23 = vector.broadcast %22 : f32 to vector<1x8x128xf32>
    %c0_7 = arith.constant 0 : index
    %c0_8 = arith.constant 0 : index
    %c0_9 = arith.constant 0 : index
    %24 = vector.load %arg3[%c0_7, %c0_8, %c0_9] : memref<1x8x128xf32, #tpu.memory_space<vmem>>, vector<1x8x128xf32>
    tpu.vector_store %arg3[%c0_7, %c0_8, %c0_9], %23 {strides = array<i32>} : memref<1x8x128xf32, #tpu.memory_space<vmem>>, vector<1x8x128xf32>,
    return
  }
  func.func @transform_0(%arg0: i32) -> (i32, i32) {
    %c0_i32 = arith.constant 0 : i32
    %c0_i32_0 = arith.constant 0 : i32
    return %arg0, %c0_i32 : i32, i32
  }
  func.func @transform_1(%arg0: i32) -> (i32, i32) {
    %c0_i32 = arith.constant 0 : i32
    %c0_i32_0 = arith.constant 0 : i32
    return %arg0, %c0_i32 : i32, i32
  }
  func.func @transform_2(%arg0: i32) -> (i32, i32, i32) {
    %c0_i32 = arith.constant 0 : i32
    %c0_i32_0 = arith.constant 0 : i32
    %c0_i32_1 = arith.constant 0 : i32
    return %arg0, %c0_i32, %c0_i32_0 : i32, i32, i32
  }
}

</mosaic_0001>

<llo_original>
// kernel: focal_loss.1
$region0: #{focal_loss.1}
  #allocation0 [shape = 'u32[]', space=smem, size = 0x4, offset = 0x4, fixed_abs, tag = 'smem constant byte address 0x4 - core index']
  #allocation1 [shape = 'u32[144,128]{1,0:T(1,128)}', space=vmem, size = 0x12000, scoped, tag = 'internal scratch']
  %s0 = inlined_call_operand.vmem [shape: f32[8,32], index: 0, kind: input, shape index: {}]
  %s1 = inlined_call_operand.vmem [shape: s32[8,1], index: 1, kind: input, shape index: {}]
  %s2 = inlined_call_operand.vmem [shape: f32[1,8,128], index: 2, kind: output, shape index: {}]
  %s3 = sld [smem:[#allocation0]]
  $region18: #{focal_loss.1} parent=0
    _
  %s5 = ssub.s32 1, %s3
  %s6 = scalar_select 0, %s5, %s3
  // Predicated region
  $region2: #{focal_loss.1} parent=0 // pred_check
    _
  $region3: #{focal_loss.1} parent=0 // pred_check_branch
    %8 = sbr.rel (0) target = $region5
  $region4: #{focal_loss.1} parent=0 // pred_region
    _
  $region5: #{focal_loss.1} parent=0 // pred_fallthru
    _
  // Predicated region
  $region6: #{focal_loss.1} parent=0 // pred_check
    _
  $region7: #{focal_loss.1} parent=0 // pred_check_branch
    %10 = sbr.rel (0) target = $region9
  $region8: #{focal_loss.1} parent=0 // pred_region
    _
  $region9: #{focal_loss.1} parent=0 // pred_fallthru
    _
  %v11 = vld [vmem:[%s0] sm:$0xff]
  %v12 = vld [vmem:[%s1] sm:$0xff]
  %vm13 = vcmask 261120
  %v14 = vsel %vm13, %v11, -inf
  %15 = vmax.xlane.f32.xlu0 %v14
  %v16 = vpop.xlane.xlu0 %15
  %v17 = vsub.f32 %v11, %v16
  %v18 = vmul.f32 %v17, 1.442695
  %v19 = vpow.pop %v18
  %v20 = vsel %vm13, %v19, 0.0
  %21 = vadd.xlane.f32.xlu0 %v20
  %v22 = vpop.xlane.xlu0 %21
  %v23 = vlog2.pop %v22
  %v24 = vmul.f32 %v23, 0.6931472
  %v25 = vadd.f32 %v16, %v24
  %v26 = vlaneseq
  %v27 = vand.u32 %v26, 127
  %28 = vset.pattern.permute.xlu0 0
  %29 = vperm.xlu0 %28, %v12
  %v30 = vpop.permute.xlu0 %29
  %vm31 = vcmp.eq.s32.totalorder %v27, %v30
  %v32 = vsel %vm31, %v11, 0.0
  %v33 = vsel %vm13, %v32, 0.0
  %34 = vadd.xlane.f32.xlu0 %v33
  %v35 = vpop.xlane.xlu0 %34
  %v36 = vsub.f32 %v25, %v35
  %vm37 = vcmask 7168
  %v38 = vsel %vm37, %v36, 0.0
  %39 = vadd.xlane.f32.xlu0 %v38
  %v40 = vpop.xlane.xlu0 %39
  %v41 = vrot.slane %v40, 4
  %v42 = vadd.f32 %v40, %v41
  %v43 = vrot.slane %v42, 2
  %v44 = vadd.f32 %v42, %v43
  %v45 = vrot.slane %v44, 1
  %v46 = vadd.f32 %v44, %v45
  %s47 = vtos %v46
  %v48 = vstv %s47
  %49 = vst [vmem:[%s2] sm:$0xff] %v48
  // Predicated region
  $region10: #{focal_loss.1} parent=0 // pred_check
    _
  $region11: #{focal_loss.1} parent=0 // pred_check_branch
    %51 = sbr.rel (0) target = $region13
  $region12: #{focal_loss.1} parent=0 // pred_region
    _
  $region13: #{focal_loss.1} parent=0 // pred_fallthru
    _
  // Predicated region
  $region14: #{focal_loss.1} parent=0 // pred_check
    _
  $region15: #{focal_loss.1} parent=0 // pred_check_branch
    %53 = sbr.rel (0) target = $region17
  $region16: #{focal_loss.1} parent=0 // pred_region
    _
  $region17: #{focal_loss.1} parent=0 // pred_fallthru
    _

</llo_original>
